<compile_context>
chip_gen: v6e
topology: v6e:2x2x1
jax: 0.10.0
libtpu: 0.0.40
codegen_flags: <defaults>
</compile_context>

<pallas_src>
import functools

import numpy as np
import jax
import jax.numpy as jnp
from jax.experimental import pallas as pl
from jax.experimental.pallas import tpu as pltpu

_TARGET_TILE_BYTES = 4 * 1024 * 1024     # ~4 MiB per tile (amortizes step cost)
_MAX_LANE = 2048                         # lane width cap (multiple of 128)
_VMEM_LIMIT_BYTES = 32 * 1024 * 1024     # safe on v5e / v6e / v7x


def _identity_kernel(x_ref, o_ref):
    # Straight VMEM tile copy — the entire forward pass of ResBlock.
    o_ref[...] = x_ref[...]


def _pick_lane(total: int) -> int:
    """Largest lane width (multiple of 128, <= _MAX_LANE) dividing `total`,
    preferring widths that leave rows a multiple of 8."""
    candidates = [128 * k for k in range(1, _MAX_LANE // 128 + 1)
                  if total % (128 * k) == 0]
    if not candidates:
        return 0
    return max(candidates, key=lambda lane: ((total // lane) % 8 == 0, lane))


def _pick_block_rows(rows: int, lanes: int, itemsize: int) -> int:
    """Row-block sized by a byte budget, multiple of 8 (or full extent)."""
    budget_rows = max(8, (_TARGET_TILE_BYTES // (lanes * itemsize)) // 8 * 8)
    block_rows = min(rows, budget_rows)
    # v7x megacore: make sure the grid has >= 2 tiles when there is enough
    # work, so both TensorCores get a share of this mem-bound copy.
    if block_rows == rows and rows >= 16:
        half = (rows + 1) // 2
        block_rows = min(rows, ((half + 7) // 8) * 8)
    return block_rows


def _identity_copy_2d(x2d: jax.Array) -> jax.Array:
    rows, lanes = x2d.shape
    itemsize = x2d.dtype.itemsize
    block_rows = _pick_block_rows(rows, lanes, itemsize)
    grid = (pl.cdiv(rows, block_rows),)
    total_bytes = rows * lanes * itemsize
    return pl.pallas_call(
        _identity_kernel,
        out_shape=jax.ShapeDtypeStruct(x2d.shape, x2d.dtype),
        grid=grid,
        in_specs=[pl.BlockSpec((block_rows, lanes), lambda i: (i, 0))],
        out_specs=pl.BlockSpec((block_rows, lanes), lambda i: (i, 0)),
        input_output_aliases={0: 0},            # output buffer == input buffer
        cost_estimate=pl.CostEstimate(
            flops=0, transcendentals=0, bytes_accessed=2 * total_bytes),
        compiler_params=pltpu.CompilerParams(
            dimension_semantics=("parallel",),
            vmem_limit_bytes=_VMEM_LIMIT_BYTES),
    )(x2d)


@functools.partial(jax.jit, donate_argnums=0)
def _materialized_identity(x: jax.Array) -> jax.Array:
    """Identity that forces a Pallas copy (only for callers that need a fresh
    materialized buffer; the donated input buffer is reused when possible)."""
    shape = x.shape
    total = int(np.prod(shape))
    lane = _pick_lane(total)
    if lane == 0:
        # TODO(synk): element count not a multiple of 128 — no lane-dense
        # tiling exists; the identity is returned directly in that case.
        return x
    # Layout plumbing only (identity is layout-agnostic): lane-dense slab.
    x2d = x.reshape(total // lane, lane)
    return _identity_copy_2d(x2d).reshape(shape)


def resblock_forward(x: jax.Array, *, materialize: bool = False) -> jax.Array:
    """ResBlock.forward: the empty nn.Sequential is a no-op -> identity.

    Default (fast) path returns `x` unchanged: zero HBM traffic, zero launch
    overhead — strictly optimal per the performance review.  Pass
    `materialize=True` only if a freshly materialized output buffer is
    explicitly required; that path runs the tuned Pallas copy kernel.
    """
    if not materialize:
        return x
    return _materialized_identity(x)


if __name__ == "__main__":
    key = jax.random.PRNGKey(0)
    # ResBlock(4, 4): the empty Sequential has no parameters to initialize.
    x = jax.random.normal(key, (2, 4, 16, 16), dtype=jnp.float32)
    x_host = np.asarray(x)

    # Fast path: pure identity, no kernel launched.
    y_fast = resblock_forward(x)
    jax.block_until_ready(y_fast)
    assert y_fast.shape == x_host.shape and y_fast.dtype == x_host.dtype
    assert np.array_equal(np.asarray(y_fast), x_host)

    # Materialized path: exercises the Pallas copy kernel once.
    x2 = jnp.asarray(x_host)          # fresh buffer (it will be donated)
    y_copy = resblock_forward(x2, materialize=True)
    jax.block_until_ready(y_copy)
    assert y_copy.shape == x_host.shape and y_copy.dtype == x_host.dtype
    assert np.array_equal(np.asarray(y_copy), x_host)

    print("KERNEL_OK")
</pallas_src>

<mosaic_0001>
module attributes {stable_mosaic.version = 11 : i64} {
  func.func @_identity_kernel(%arg0: i32, %arg1: memref<8x256xf32, #tpu.memory_space<vmem>>, %arg2: memref<8x256xf32, #tpu.memory_space<vmem>>) attributes {dimension_semantics = [#tpu.dimension_semantics<parallel>], iteration_bounds = array<i64: 1>, scalar_prefetch = 0 : i64, scratch_operands = 0 : i64, tpu.core_type = #tpu.core_type<tc>, window_params = [{transform_indices = @transform_0, window_bounds = array<i64: 8, 256>}, {transform_indices = @transform_1, window_bounds = array<i64: 8, 256>}]} {
    %c0 = arith.constant 0 : index
    %c0_0 = arith.constant 0 : index
    %0 = vector.load %arg1[%c0, %c0_0] : memref<8x256xf32, #tpu.memory_space<vmem>>, vector<8x256xf32>
    %c0_1 = arith.constant 0 : index
    %c0_2 = arith.constant 0 : index
    %1 = vector.load %arg2[%c0_1, %c0_2] : memref<8x256xf32, #tpu.memory_space<vmem>>, vector<8x256xf32>
    tpu.vector_store %arg2[%c0_1, %c0_2], %0 {strides = array<i32>} : memref<8x256xf32, #tpu.memory_space<vmem>>, vector<8x256xf32>,
    return
  }
  func.func @transform_0(%arg0: i32) -> (i32, i32) {
    %c0_i32 = arith.constant 0 : i32
    %c0_i32_0 = arith.constant 0 : i32
    return %arg0, %c0_i32 : i32, i32
  }
  func.func @transform_1(%arg0: i32) -> (i32, i32) {
    %c0_i32 = arith.constant 0 : i32
    %c0_i32_0 = arith.constant 0 : i32
    return %arg0, %c0_i32 : i32, i32
  }
}

</mosaic_0001>

<llo_original>
// kernel: _materialized_identity.1
$region0: #{_materialized_identity.1}
  #allocation0 [shape = 'u32[]', space=smem, size = 0x4, offset = 0x4, fixed_abs, tag = 'smem constant byte address 0x4 - core index']
  #allocation1 [shape = 'u32[144,128]{1,0:T(1,128)}', space=vmem, size = 0x12000, scoped, tag = 'internal scratch']
  %s0 = inlined_call_operand.vmem [shape: f32[8,256], index: 0, kind: input, shape index: {}, may-alias: {0,1}]
  %s1 = inlined_call_operand.vmem [shape: f32[8,256], index: 1, kind: output, shape index: {}, may-alias: {0,1}]
  %s2 = sld [smem:[#allocation0]]
  $region14: #{_materialized_identity.1} parent=0
    _
  %s4 = ssub.s32 1, %s2
  %s5 = scalar_select 0, %s4, %s2
  // Predicated region
  $region2: #{_materialized_identity.1} parent=0 // pred_check
    _
  $region3: #{_materialized_identity.1} parent=0 // pred_check_branch
    %7 = sbr.rel (0) target = $region5
  $region4: #{_materialized_identity.1} parent=0 // pred_region
    _
  $region5: #{_materialized_identity.1} parent=0 // pred_fallthru
    _
  %v8 = vld [vmem:[%s0] sm:$0xff]
  %v9 = vld [vmem:[%s0 + $0x8] sm:$0xff]
  %10 = vst [vmem:[%s1] sm:$0xff] %v8
  %11 = vst [vmem:[%s1 + $0x8] sm:$0xff] %v9
  // Predicated region
  $region6: #{_materialized_identity.1} parent=0 // pred_check
    _
  $region7: #{_materialized_identity.1} parent=0 // pred_check_branch
    %13 = sbr.rel (0) target = $region9
  $region8: #{_materialized_identity.1} parent=0 // pred_region
    _
  $region9: #{_materialized_identity.1} parent=0 // pred_fallthru
    _
  // Predicated region
  $region10: #{_materialized_identity.1} parent=0 // pred_check
    _
  $region11: #{_materialized_identity.1} parent=0 // pred_check_branch
    %15 = sbr.rel (0) target = $region13
  $region12: #{_materialized_identity.1} parent=0 // pred_region
    _
  $region13: #{_materialized_identity.1} parent=0 // pred_fallthru
    _

</llo_original>
